<compile_context>
chip_gen: v7x
topology: tpu7x:2x2x1
jax: 0.10.0
libtpu: 0.0.40
codegen_flags: <defaults>
</compile_context>

<pallas_src>
import jax
import jax.numpy as jnp
from jax.experimental import pallas as pl
from jax.experimental.pallas import tpu as pltpu


def _make_hbm_copy_kernel(chunks):
    """Build a kernel that DMAs the given static (start_row, n_rows) chunks.

    Both refs are raw HBM refs (memory_space=pl.ANY); the copies go directly
    HBM->HBM with no VMEM staging.  All chunk DMAs are started before any
    wait so multiple transfers stay in flight.
    """

    def kernel(table_ref, out_ref, sem):
        copies = []
        for c, (start, size) in enumerate(chunks):
            cp = pltpu.make_async_copy(
                table_ref.at[pl.ds(start, size), :],
                out_ref.at[pl.ds(start, size), :],
                sem.at[c],
            )
            cp.start()
            copies.append(cp)
        for cp in copies:
            cp.wait()

    return kernel


def positional_embedding(table: jax.Array, n: int, *,
                         max_chunks: int = 4,
                         min_chunk_bytes: int = 1 << 20) -> jax.Array:
    """Equivalent of PositionalEmbedding.forward(n): rows [0, n) of the table."""
    max_len, d_model = table.shape
    if not (0 < n <= max_len):
        raise ValueError(f"n={n} must satisfy 0 < n <= max_len={max_len}")

    # Early-out: the full table is requested -> no copy, no kernel launch.
    if n == max_len:
        return table

    # Split the n-row copy into up to `max_chunks` chunks, but never make a
    # chunk smaller than ~min_chunk_bytes (tiny DMAs are descriptor-bound).
    itemsize = jnp.dtype(table.dtype).itemsize
    total_bytes = n * d_model * itemsize
    num_chunks = int(max(1, min(max_chunks, total_bytes // max(min_chunk_bytes, 1))))
    num_chunks = min(num_chunks, n)

    base, rem = divmod(n, num_chunks)
    chunks = []
    start = 0
    for c in range(num_chunks):
        size = base + (1 if c < rem else 0)
        if size == 0:
            continue
        chunks.append((start, size))
        start += size
    chunks = tuple(chunks)

    return pl.pallas_call(
        _make_hbm_copy_kernel(chunks),
        out_shape=jax.ShapeDtypeStruct((n, d_model), table.dtype),
        in_specs=[pl.BlockSpec(memory_space=pl.ANY)],   # raw HBM ref, no auto-DMA
        out_specs=pl.BlockSpec(memory_space=pl.ANY),    # raw HBM ref, DMA target
        scratch_shapes=[pltpu.SemaphoreType.DMA((len(chunks),))],
    )(table)


if __name__ == "__main__":
    key = jax.random.PRNGKey(0)

    def check(max_len, d_model, n, **kwargs):
        # Deterministic params: nn.Embedding initializes weights ~ N(0, 1).
        k = jax.random.fold_in(key, max_len * 131 + d_model * 7 + n)
        w = jax.random.normal(k, (max_len, d_model), dtype=jnp.float32)
        out = jax.block_until_ready(positional_embedding(w, n, **kwargs))
        ref = w[:n]
        assert out.shape == (n, d_model), out.shape
        assert out.dtype == jnp.float32, out.dtype
        assert jnp.array_equal(out, ref), f"mismatch for {(max_len, d_model, n)}"

    # Primary small config implied by the module (seq=8, hidden=32).
    check(max_len=16, d_model=32, n=8)
    # Uneven n (no alignment constraints on the DMA path).
    check(max_len=96, d_model=32, n=52)
    # Tiny n (< 8 rows): still a single direct HBM->HBM DMA.
    check(max_len=16, d_model=32, n=5)
    # n == max_len: early-out, no kernel launch.
    check(max_len=16, d_model=32, n=16)
    # Force the multi-chunk (multiple outstanding DMAs) path at a small shape.
    check(max_len=512, d_model=128, n=384, min_chunk_bytes=4096)

    print("KERNEL_OK")
</pallas_src>

<mosaic_0001>
module attributes {stable_mosaic.version = 11 : i64} {
  func.func @kernel(%arg0: memref<16x32xf32, #tpu.memory_space<any>>, %arg1: memref<8x32xf32, #tpu.memory_space<any>>, %arg2: memref<1x!tpu.dma_semaphore, #tpu.memory_space<semaphore_mem>>) attributes {dimension_semantics = [], scalar_prefetch = 0 : i64, scratch_operands = 1 : i64, tpu.core_type = #tpu.core_type<tc>} {
    %c0_i32 = arith.constant 0 : i32
    %c0_i32_0 = arith.constant 0 : i32
    %c0_i32_1 = arith.constant 0 : i32
    %0 = tpu.memref_slice %arg0[%c0_i32_0, %c0_i32_1] : memref<16x32xf32, #tpu.memory_space<any>> -> memref<8x32xf32, #tpu.memory_space<any>>
    %c0_i32_2 = arith.constant 0 : i32
    %c0_i32_3 = arith.constant 0 : i32
    %1 = tpu.memref_slice %arg1[%c0_i32_2, %c0_i32_3] : memref<8x32xf32, #tpu.memory_space<any>> -> memref<8x32xf32, #tpu.memory_space<any>>
    %2 = tpu.memref_slice %arg2[%c0_i32] : memref<1x!tpu.dma_semaphore, #tpu.memory_space<semaphore_mem>> -> memref<1x!tpu.dma_semaphore, #tpu.memory_space<semaphore_mem>>
    %3 = tpu.memref_squeeze %2 : memref<1x!tpu.dma_semaphore, #tpu.memory_space<semaphore_mem>> -> memref<!tpu.dma_semaphore, #tpu.memory_space<semaphore_mem>>
    tpu.enqueue_dma source(%0 : memref<8x32xf32, #tpu.memory_space<any>>) target(%1 : memref<8x32xf32, #tpu.memory_space<any>>) target_semaphore(%3 : memref<!tpu.dma_semaphore, #tpu.memory_space<semaphore_mem>>)
    %c0_i32_4 = arith.constant 0 : i32
    %c0_i32_5 = arith.constant 0 : i32
    %c0_i32_6 = arith.constant 0 : i32
    %4 = tpu.memref_slice %arg0[%c0_i32_5, %c0_i32_6] : memref<16x32xf32, #tpu.memory_space<any>> -> memref<8x32xf32, #tpu.memory_space<any>>
    %c0_i32_7 = arith.constant 0 : i32
    %c0_i32_8 = arith.constant 0 : i32
    %5 = tpu.memref_slice %arg1[%c0_i32_7, %c0_i32_8] : memref<8x32xf32, #tpu.memory_space<any>> -> memref<8x32xf32, #tpu.memory_space<any>>
    %6 = tpu.memref_slice %arg2[%c0_i32_4] : memref<1x!tpu.dma_semaphore, #tpu.memory_space<semaphore_mem>> -> memref<1x!tpu.dma_semaphore, #tpu.memory_space<semaphore_mem>>
    %7 = tpu.memref_squeeze %6 : memref<1x!tpu.dma_semaphore, #tpu.memory_space<semaphore_mem>> -> memref<!tpu.dma_semaphore, #tpu.memory_space<semaphore_mem>>
    tpu.wait_dma2 semaphore(%7 : memref<!tpu.dma_semaphore, #tpu.memory_space<semaphore_mem>>) src(%4 : memref<8x32xf32, #tpu.memory_space<any>>) dst(%5 : memref<8x32xf32, #tpu.memory_space<any>>)
    return
  }
}

</mosaic_0001>

<llo_original>
// kernel: tpu_custom_call.1
$region0: #{tpu_custom_call.1}
  #allocation0 [shape = 'u32[]', space=smem, size = 0x4, offset = 0x4, fixed_abs, tag = 'smem constant byte address 0x4 - core index']
  #allocation1 [shape = 'u32[144,128]{1,0:T(1,128)}', space=vmem, size = 0x12000, scoped, tag = 'internal scratch']
  #allocation2 [shape = 's32[1]{0}', space=sflag, size = 0x4, scoped, tag = 'scratch operand']
  #allocation3 [shape = 's32[]', space=sflag, size = 0x4, offset = 0, fixed_abs, tag = 'sflag constant byte address 0x0 - dummy sync flag']
  #allocation4 [shape = 'u32[0]{0}', space=smem, size = 0, offset = 0, fixed_abs, tag = 'smem constant byte address 0x0 - null']
  %s0 = inlined_call_operand.hbm [shape: f32[16,32], index: 0, kind: input, shape index: {}]
  %s1 = inlined_call_operand.hbm [shape: f32[8,32], index: 1, kind: output, shape index: {}]
  %s2 = sld [smem:[#allocation0]]
  $region2: #{tpu_custom_call.1} parent=0
    _
  %s4 = ssub.s32 1, %s2
  %s5 = scalar_select 0, %s4, %s2
  %s7 = sshll.u32 1, 14
  %s8 = sxor.u32 4294967295, %s7
  %s11 = sshll.u32 3, 24
  %s12 = sxor.u32 4294967295, %s11
  %s13 = sand.u32 0, %s12
  %s15 = sor.u32 %s13, 0
  %18 = dma.general %s0, 128, %s1, [#allocation2], [#allocation3], [#allocation4], %s15, 0
  %s19 = smul.u32 8, 1
  %s20 = sshll.u32 %s19, 4
  %21 = dma.done [#allocation2], %s20
  %22 = vsyncmov [#allocation2]
  %s23 = vpop.sfrf %22
  %p24 = scmp.eq.s32.totalorder %s23, 0
  %p25 = pneg %p24
  %27 = shalt.err (%p25)

</llo_original>
